<compile_context>
chip_gen: v5e
topology: v5e:2x2
jax: 0.10.0
libtpu: 0.0.40
codegen_flags: <defaults>
</compile_context>

<pallas_src>
import functools

import jax
import jax.numpy as jnp
from jax.experimental import pallas as pl
from jax.experimental.pallas import tpu as pltpu


def mlp2_kernel(x_ref, w1_ref, b1_ref, w2_ref, b2_ref, w3_ref, b3_ref, o_ref):
    # x:  [tb, D_in]   (producer dtype, e.g. f32 — cast to bf16 HERE, not in XLA)
    # w1: [D_in, Hp], w2: [Hp, Hp], w3: [Hp, F]   (bf16, pre-transposed/padded)
    # b1/b2: [1, Hp], b3: [1, F]                  (f32)
    x = x_ref[...].astype(w1_ref.dtype)  # free VPU work hidden under the x DMA
    h1 = jnp.dot(x, w1_ref[...], preferred_element_type=jnp.float32) + b1_ref[...]
    h1 = jnp.maximum(h1, 0.0).astype(w2_ref.dtype)
    h2 = jnp.dot(h1, w2_ref[...], preferred_element_type=jnp.float32) + b2_ref[...]
    h2 = jnp.maximum(h2, 0.0).astype(w3_ref.dtype)
    out = jnp.dot(h2, w3_ref[...], preferred_element_type=jnp.float32) + b3_ref[...]
    o_ref[...] = out.astype(o_ref.dtype)


def prepare_params(params, compute_dtype=jnp.bfloat16, lane_pad=128):
    """One-time conversion (do at init, NOT per forward call).

    PyTorch-layout [out, in] weights -> kernel layout [in, out] in compute_dtype,
    biases -> f32 row vectors [1, out]. The hidden dim is zero-padded up to a
    multiple of `lane_pad` (128 lanes) so intermediates / weight tiles are
    lane-dense; the zero rows/cols are mathematically inert.
    """
    hidden = params["fc_1_w"].shape[0]
    feat = params["outfc_w"].shape[0]
    in_dim = params["fc_1_w"].shape[1]
    h_pad = ((hidden + lane_pad - 1) // lane_pad) * lane_pad

    def w(name, rows, cols):
        m = jnp.asarray(params[name], jnp.float32).T                 # [in, out]
        m = jnp.pad(m, ((0, rows - m.shape[0]), (0, cols - m.shape[1])))
        return m.astype(compute_dtype)

    def b(name, cols):
        v = jnp.asarray(params[name], jnp.float32)
        v = jnp.pad(v, (0, cols - v.shape[0]))
        return v[None, :]

    return {
        "w1": w("fc_1_w", in_dim, h_pad), "b1": b("fc_1_b", h_pad),
        "w2": w("fc_2_w", h_pad, h_pad), "b2": b("fc_2_b", h_pad),
        "w3": w("outfc_w", h_pad, feat), "b3": b("outfc_b", feat),
    }


def _round_up(v, m):
    return ((v + m - 1) // m) * m


@functools.partial(jax.jit, static_argnames=("block_b", "out_dtype"))
def mlp2_forward(x, kparams, block_b=1024, out_dtype=jnp.float32):
    """x: [B, C, H, W] (or any [B, ...]); kparams: output of prepare_params."""
    batch = x.shape[0]
    # Flatten only; NO dtype cast here (cast lives inside the kernel so x is
    # read from HBM exactly once, in its producer dtype).
    y = x.reshape(batch, -1)

    w1, b1 = kparams["w1"], kparams["b1"]
    w2, b2 = kparams["w2"], kparams["b2"]
    w3, b3 = kparams["w3"], kparams["b3"]
    in_dim, h_pad = w1.shape
    feat = w3.shape[1]
    assert y.shape[1] == in_dim, (y.shape, in_dim)

    out_dtype = jnp.dtype(out_dtype)
    x_isz = y.dtype.itemsize
    o_isz = out_dtype.itemsize
    w_isz = w1.dtype.itemsize

    # ---- batch tile selection ------------------------------------------------
    # (a) large tiles amortize the ~0.35us/step grid overhead and the weight DMA;
    # (b) >=2 grid steps when batch > 8 so the "parallel" axis spans both v7x
    #     TensorCores;
    # (c) capped by a VMEM budget so it is safe on v5e (16 MiB default scoped)
    #     and v7x (64 MiB physical / 32 MiB default scoped).
    weight_bytes = (2 * w_isz * (w1.size + w2.size + w3.size)   # double-buffered
                    + 2 * 4 * (b1.size + b2.size + b3.size))
    per_row_bytes = (2 * in_dim * x_isz        # double-buffered x tile
                     + 2 * feat * o_isz        # double-buffered out tile
                     + in_dim * w_isz          # in-kernel bf16 copy of x
                     + 12 * h_pad + 4 * feat)  # f32/bf16 h1, h2, out temporaries
    vmem_budget = 40 * 1024 * 1024

    if batch <= 8:
        tb = batch                                     # single full-extent block
    else:
        two_way = _round_up((batch + 1) // 2, 8)       # >=2 steps for v7x megacore
        tb = max(8, (min(block_b, two_way) // 8) * 8)
        fit_rows = (vmem_budget - weight_bytes) // per_row_bytes
        tb = min(tb, max(8, (fit_rows // 8) * 8))
    grid = (pl.cdiv(batch, tb),)

    vmem_limit = int(min(max(per_row_bytes * tb + weight_bytes + (4 << 20),
                             32 << 20),
                         48 << 20))

    flops = 2 * batch * (in_dim * h_pad + h_pad * h_pad + h_pad * feat)
    bytes_accessed = (
        y.size * x_isz                                            # x read once (f32)
        + w_isz * (w1.size + w2.size + w3.size)
        + 4 * (b1.size + b2.size + b3.size)
        + batch * feat * o_isz)                                   # output writeback

    # Weights/biases: constant index_map -> same block every grid step, so they
    # stay resident in VMEM and are only fetched once.
    # (pipeline_mode=pl.Buffered(1) on these specs would reclaim the unused second
    # buffer ~300 KiB; left off until in_dim approaches the VMEM ceiling.)
    resident = lambda shape: pl.BlockSpec(shape, lambda i: (0, 0))

    out = pl.pallas_call(
        mlp2_kernel,
        out_shape=jax.ShapeDtypeStruct((batch, feat), out_dtype),
        grid_spec=pltpu.PrefetchScalarGridSpec(
            num_scalar_prefetch=0,
            grid=grid,
            in_specs=[
                pl.BlockSpec((tb, in_dim), lambda i: (i, 0)),   # x tile
                resident((in_dim, h_pad)),                      # w1
                resident((1, h_pad)),                           # b1
                resident((h_pad, h_pad)),                       # w2
                resident((1, h_pad)),                           # b2
                resident((h_pad, feat)),                        # w3
                resident((1, feat)),                            # b3
            ],
            out_specs=pl.BlockSpec((tb, feat), lambda i: (i, 0)),
        ),
        compiler_params=pltpu.CompilerParams(
            dimension_semantics=("parallel",),   # shard batch tiles across TCs
            vmem_limit_bytes=vmem_limit,
        ),
        cost_estimate=pl.CostEstimate(
            flops=flops, transcendentals=0, bytes_accessed=bytes_accessed),
    )(y, w1, b1, w2, b2, w3, b3)
    # TODO(synk): if input_dim grows so large that even 8 rows of x plus w1
    # overflow VMEM, add a K-tiled ("arbitrary") grid axis with an f32
    # accumulator scratch instead of relying on the row cap above.
    return out


def init_params(key, input_dim, hidden_dim=64, feature_dim=64):
    """Deterministic synthetic init (stand-in for layer_init; scaled normals)."""
    keys = jax.random.split(key, 10)
    std = 0.1

    def lin(kw, kb, fan_in, fan_out):
        w = std * jax.random.normal(kw, (fan_out, fan_in), dtype=jnp.float32)
        b = jnp.zeros((fan_out,), dtype=jnp.float32)
        return w, b

    fc1_w, fc1_b = lin(keys[0], keys[1], input_dim, hidden_dim)
    fc2_w, fc2_b = lin(keys[2], keys[3], hidden_dim, hidden_dim)
    fc3_w, fc3_b = lin(keys[4], keys[5], hidden_dim, hidden_dim)  # unused in forward
    fc4_w, fc4_b = lin(keys[6], keys[7], hidden_dim, hidden_dim)  # unused in forward
    out_w, out_b = lin(keys[8], keys[9], hidden_dim, feature_dim)
    return {
        "fc_1_w": fc1_w, "fc_1_b": fc1_b,
        "fc_2_w": fc2_w, "fc_2_b": fc2_b,
        "fc_3_w": fc3_w, "fc_3_b": fc3_b,
        "fc_4_w": fc4_w, "fc_4_b": fc4_b,
        "outfc_w": out_w, "outfc_b": out_b,
    }


def reference_forward_f32(x, params):
    """Pure-JAX f32 reference mirroring the PyTorch forward exactly."""
    batch = x.shape[0]
    y = x.reshape(batch, -1)
    y = jnp.maximum(y @ params["fc_1_w"].T + params["fc_1_b"], 0.0)
    y = jnp.maximum(y @ params["fc_2_w"].T + params["fc_2_b"], 0.0)
    return y @ params["outfc_w"].T + params["outfc_b"]


def reference_forward_bf16(x, kparams):
    """Pure-JAX reference matching the kernel's bf16-in / f32-accumulate path."""
    batch = x.shape[0]
    y = x.reshape(batch, -1).astype(kparams["w1"].dtype)
    h1 = jnp.maximum(
        jnp.dot(y, kparams["w1"], preferred_element_type=jnp.float32) + kparams["b1"], 0.0)
    h1 = h1.astype(kparams["w2"].dtype)
    h2 = jnp.maximum(
        jnp.dot(h1, kparams["w2"], preferred_element_type=jnp.float32) + kparams["b2"], 0.0)
    h2 = h2.astype(kparams["w3"].dtype)
    return jnp.dot(h2, kparams["w3"], preferred_element_type=jnp.float32) + kparams["b3"]


if __name__ == "__main__":
    key = jax.random.PRNGKey(0)
    k_x, k_x2, k_p = jax.random.split(key, 3)

    B, C, H, W = 2, 4, 16, 16
    hidden_dim, feature_dim = 64, 64
    input_dim = C * H * W

    x = jax.random.normal(k_x, (B, C, H, W), dtype=jnp.float32)
    params = init_params(k_p, input_dim, hidden_dim, feature_dim)
    kparams = prepare_params(params)  # one-time: transpose + bf16 cast + lane pad

    # --- small batch (single full-extent tile, grid=(1,)) ---
    out = jax.block_until_ready(mlp2_forward(x, kparams))
    assert out.shape == (B, feature_dim)
    ref_bf16 = reference_forward_bf16(x, kparams)
    assert jnp.allclose(out, ref_bf16, atol=2e-2, rtol=2e-2), "mismatch vs bf16 reference"
    ref_f32 = reference_forward_f32(x, params)
    assert jnp.allclose(out, ref_f32, atol=1e-1, rtol=1e-1), "mismatch vs f32 reference"

    # --- larger batch: exercises the multi-step grid (2 tiles for v7x's two
    #     TensorCores) and the masked partial last tile (300 % tile != 0). ---
    B2 = 300
    x2 = jax.random.normal(k_x2, (B2, C, H, W), dtype=jnp.float32)
    out2 = jax.block_until_ready(mlp2_forward(x2, kparams))
    assert out2.shape == (B2, feature_dim)
    ref2_bf16 = reference_forward_bf16(x2, kparams)
    assert jnp.allclose(out2, ref2_bf16, atol=2e-2, rtol=2e-2), "mismatch vs bf16 reference (B=300)"
    ref2_f32 = reference_forward_f32(x2, params)
    assert jnp.allclose(out2, ref2_f32, atol=1e-1, rtol=1e-1), "mismatch vs f32 reference (B=300)"

    print("KERNEL_OK")
</pallas_src>

<mosaic_0001>
module attributes {stable_mosaic.version = 11 : i64} {
  func.func @mlp2_kernel(%arg0: i32, %arg1: memref<2x1024xf32, #tpu.memory_space<vmem>>, %arg2: memref<1024x128xbf16, #tpu.memory_space<vmem>>, %arg3: memref<1x128xf32, #tpu.memory_space<vmem>>, %arg4: memref<128x128xbf16, #tpu.memory_space<vmem>>, %arg5: memref<1x128xf32, #tpu.memory_space<vmem>>, %arg6: memref<128x64xbf16, #tpu.memory_space<vmem>>, %arg7: memref<1x64xf32, #tpu.memory_space<vmem>>, %arg8: memref<2x64xf32, #tpu.memory_space<vmem>>) attributes {dimension_semantics = [#tpu.dimension_semantics<parallel>], iteration_bounds = array<i64: 1>, scalar_prefetch = 0 : i64, scratch_operands = 0 : i64, tpu.core_type = #tpu.core_type<tc>, window_params = [{transform_indices = @transform_0, window_bounds = array<i64: 2, 1024>}, {pipeline_mode = #tpu.pipeline_mode<synchronous>, transform_indices = @transform_1, window_bounds = array<i64: 1024, 128>}, {pipeline_mode = #tpu.pipeline_mode<synchronous>, transform_indices = @transform_2, window_bounds = array<i64: 1, 128>}, {pipeline_mode = #tpu.pipeline_mode<synchronous>, transform_indices = @transform_3, window_bounds = array<i64: 128, 128>}, {pipeline_mode = #tpu.pipeline_mode<synchronous>, transform_indices = @transform_4, window_bounds = array<i64: 1, 128>}, {pipeline_mode = #tpu.pipeline_mode<synchronous>, transform_indices = @transform_5, window_bounds = array<i64: 128, 64>}, {pipeline_mode = #tpu.pipeline_mode<synchronous>, transform_indices = @transform_6, window_bounds = array<i64: 1, 64>}, {transform_indices = @transform_7, window_bounds = array<i64: 2, 64>}]} {
    %c0 = arith.constant 0 : index
    %c0_0 = arith.constant 0 : index
    %0 = vector.load %arg1[%c0, %c0_0] : memref<2x1024xf32, #tpu.memory_space<vmem>>, vector<2x1024xf32>
    %1 = arith.truncf %0 : vector<2x1024xf32> to vector<2x1024xbf16>
    %c0_1 = arith.constant 0 : index
    %c0_2 = arith.constant 0 : index
    %2 = vector.load %arg2[%c0_1, %c0_2] : memref<1024x128xbf16, #tpu.memory_space<vmem>>, vector<1024x128xbf16>
    %cst = arith.constant dense<0.000000e+00> : vector<2x128xf32>
    %3 = tpu.matmul %1, %2, %cst {dimension_numbers = #tpu.dot_dimension_numbers<[1], [0], [0], [1], [0, 0, 1, 1], [], []>} : vector<2x1024xbf16>, vector<1024x128xbf16>, vector<2x128xf32> -> vector<2x128xf32>
    %c0_3 = arith.constant 0 : index
    %c0_4 = arith.constant 0 : index
    %4 = vector.load %arg3[%c0_3, %c0_4] : memref<1x128xf32, #tpu.memory_space<vmem>>, vector<1x128xf32>
    %5 = vector.broadcast %4 : vector<1x128xf32> to vector<2x128xf32>
    %6 = arith.addf %3, %5 : vector<2x128xf32>
    %cst_5 = arith.constant 0.000000e+00 : f32
    %7 = vector.broadcast %cst_5 : f32 to vector<2x128xf32>
    %8 = arith.maximumf %6, %7 : vector<2x128xf32>
    %9 = arith.truncf %8 : vector<2x128xf32> to vector<2x128xbf16>
    %c0_6 = arith.constant 0 : index
    %c0_7 = arith.constant 0 : index
    %10 = vector.load %arg4[%c0_6, %c0_7] : memref<128x128xbf16, #tpu.memory_space<vmem>>, vector<128x128xbf16>
    %cst_8 = arith.constant dense<0.000000e+00> : vector<2x128xf32>
    %11 = tpu.matmul %9, %10, %cst_8 {dimension_numbers = #tpu.dot_dimension_numbers<[1], [0], [0], [1], [0, 0, 1, 1], [], []>} : vector<2x128xbf16>, vector<128x128xbf16>, vector<2x128xf32> -> vector<2x128xf32>
    %c0_9 = arith.constant 0 : index
    %c0_10 = arith.constant 0 : index
    %12 = vector.load %arg5[%c0_9, %c0_10] : memref<1x128xf32, #tpu.memory_space<vmem>>, vector<1x128xf32>
    %13 = vector.broadcast %12 : vector<1x128xf32> to vector<2x128xf32>
    %14 = arith.addf %11, %13 : vector<2x128xf32>
    %cst_11 = arith.constant 0.000000e+00 : f32
    %15 = vector.broadcast %cst_11 : f32 to vector<2x128xf32>
    %16 = arith.maximumf %14, %15 : vector<2x128xf32>
    %17 = arith.truncf %16 : vector<2x128xf32> to vector<2x128xbf16>
    %c0_12 = arith.constant 0 : index
    %c0_13 = arith.constant 0 : index
    %18 = vector.load %arg6[%c0_12, %c0_13] : memref<128x64xbf16, #tpu.memory_space<vmem>>, vector<128x64xbf16>
    %cst_14 = arith.constant dense<0.000000e+00> : vector<2x64xf32>
    %19 = tpu.matmul %17, %18, %cst_14 {dimension_numbers = #tpu.dot_dimension_numbers<[1], [0], [0], [1], [0, 0, 1, 1], [], []>} : vector<2x128xbf16>, vector<128x64xbf16>, vector<2x64xf32> -> vector<2x64xf32>
    %c0_15 = arith.constant 0 : index
    %c0_16 = arith.constant 0 : index
    %20 = vector.load %arg7[%c0_15, %c0_16] : memref<1x64xf32, #tpu.memory_space<vmem>>, vector<1x64xf32>
    %21 = vector.broadcast %20 : vector<1x64xf32> to vector<2x64xf32>
    %22 = arith.addf %19, %21 : vector<2x64xf32>
    %c0_17 = arith.constant 0 : index
    %c0_18 = arith.constant 0 : index
    %23 = vector.load %arg8[%c0_17, %c0_18] : memref<2x64xf32, #tpu.memory_space<vmem>>, vector<2x64xf32>
    tpu.vector_store %arg8[%c0_17, %c0_18], %22 {strides = array<i32>} : memref<2x64xf32, #tpu.memory_space<vmem>>, vector<2x64xf32>,
    return
  }
  func.func @transform_0(%arg0: i32) -> (i32, i32) {
    %c0_i32 = arith.constant 0 : i32
    %c0_i32_0 = arith.constant 0 : i32
    return %arg0, %c0_i32 : i32, i32
  }
  func.func @transform_1(%arg0: i32) -> (i32, i32) {
    %c0_i32 = arith.constant 0 : i32
    %c0_i32_0 = arith.constant 0 : i32
    %c0_i32_1 = arith.constant 0 : i32
    return %c0_i32, %c0_i32_0 : i32, i32
  }
  func.func @transform_2(%arg0: i32) -> (i32, i32) {
    %c0_i32 = arith.constant 0 : i32
    %c0_i32_0 = arith.constant 0 : i32
    %c0_i32_1 = arith.constant 0 : i32
    return %c0_i32, %c0_i32_0 : i32, i32
  }
  func.func @transform_3(%arg0: i32) -> (i32, i32) {
    %c0_i32 = arith.constant 0 : i32
    %c0_i32_0 = arith.constant 0 : i32
    %c0_i32_1 = arith.constant 0 : i32
    return %c0_i32, %c0_i32_0 : i32, i32
  }
  func.func @transform_4(%arg0: i32) -> (i32, i32) {
    %c0_i32 = arith.constant 0 : i32
    %c0_i32_0 = arith.constant 0 : i32
    %c0_i32_1 = arith.constant 0 : i32
    return %c0_i32, %c0_i32_0 : i32, i32
  }
  func.func @transform_5(%arg0: i32) -> (i32, i32) {
    %c0_i32 = arith.constant 0 : i32
    %c0_i32_0 = arith.constant 0 : i32
    %c0_i32_1 = arith.constant 0 : i32
    return %c0_i32, %c0_i32_0 : i32, i32
  }
  func.func @transform_6(%arg0: i32) -> (i32, i32) {
    %c0_i32 = arith.constant 0 : i32
    %c0_i32_0 = arith.constant 0 : i32
    %c0_i32_1 = arith.constant 0 : i32
    return %c0_i32, %c0_i32_0 : i32, i32
  }
  func.func @transform_7(%arg0: i32) -> (i32, i32) {
    %c0_i32 = arith.constant 0 : i32
    %c0_i32_0 = arith.constant 0 : i32
    return %arg0, %c0_i32 : i32, i32
  }
}

</mosaic_0001>

<llo_original>
// kernel: mlp2_forward.1
$region0: #{mlp2_forward.1}
  #allocation0 [shape = 'u32[]', space=smem, size = 0x4, offset = 0x4, fixed_abs, tag = 'smem constant byte address 0x4 - core index']
  #allocation1 [shape = 'u32[72,128]{1,0:T(1,128)}', space=vmem, size = 0x9000, scoped, tag = 'internal scratch']
  %s0 = inlined_call_operand.vmem [shape: f32[2,1024], index: 0, kind: input, shape index: {}]
  %s1 = inlined_call_operand.hbm [shape: bf16[1024,128], index: 1, kind: input, shape index: {}]
  %s2 = inlined_call_operand.vmem [shape: f32[1,128], index: 2, kind: input, shape index: {}]
  %s3 = inlined_call_operand.vmem [shape: bf16[128,128], index: 3, kind: input, shape index: {}]
  %s4 = inlined_call_operand.vmem [shape: f32[1,128], index: 4, kind: input, shape index: {}]
  %s5 = inlined_call_operand.vmem [shape: bf16[128,64], index: 5, kind: input, shape index: {}]
  %s6 = inlined_call_operand.vmem [shape: f32[1,64], index: 6, kind: input, shape index: {}]
  %s7 = inlined_call_operand.hbm [shape: f32[2,64], index: 7, kind: output, shape index: {}]
  %s8 = sld [smem:[#allocation0]]
  $region42: #{mlp2_forward.1} parent=0
    _
  %s10 = ssub.s32 1, %s8
  %s11 = scalar_select 0, %s10, %s8
  $region1: #{mlp2_forward.1} parent=0
    #allocation2 [shape = 'u8[262144]{0}', space=vmem, size = 0x40000, scoped, tag = 'input window, operand 1, single buffered']
    #allocation3 [shape = 's32[1]{0}', space=sflag, size = 0x4, scoped, tag = 'scoped memory for mlp2_forward.1']
    #allocation4 [shape = 's32[1]{0}', space=sflag, size = 0x4, scoped, tag = 'scoped memory for mlp2_forward.1']
    #allocation5 [shape = 'u8[1024]{0}', space=vmem, size = 0x400, scoped, tag = 'output window, operand 0, single buffered']
    %12 = vsyncpa [#allocation3], 0
    %13 = vsyncpa [#allocation4], 0
    // Predicated region
    $region2: #{mlp2_forward.1} parent=1 // pred_check
      _
    $region3: #{mlp2_forward.1} parent=1 // pred_check_branch
      %15 = sbr.rel (0) target = $region5
    $region4: #{mlp2_forward.1} parent=1 // pred_region
      _
    $region5: #{mlp2_forward.1} parent=1 // pred_fallthru
      _
    // Predicated region
    $region6: #{mlp2_forward.1} parent=1 // pred_check
      _
    $region7: #{mlp2_forward.1} parent=1 // pred_check_branch
      %17 = sbr.rel (0) target = $region9
    $region8: #{mlp2_forward.1} parent=1 // pred_region
      %19 = vsyncadd [#allocation3], 0
      %s20 = sshll.u32 %s1, 4
      %s21 = int_to_ptr.hbm [resolvable:$true] %s20
      %s22 = sshll.u32 [#allocation2], 4
      %s23 = int_to_ptr.vmem [resolvable:$true] %s22
      %28 = dma.hbm_to_vmem [thread:$0]  %s21, 8192, %s23, [#allocation3], 64, 64, 4
    $region9: #{mlp2_forward.1} parent=1 // pred_fallthru
      _
    // Predicated region
    $region10: #{mlp2_forward.1} parent=1 // pred_check
      _
    $region11: #{mlp2_forward.1} parent=1 // pred_check_branch
      %30 = sbr.rel (0) target = $region13
    $region12: #{mlp2_forward.1} parent=1 // pred_region
      _
    $region13: #{mlp2_forward.1} parent=1 // pred_fallthru
      _
    // Predicated region
    $region14: #{mlp2_forward.1} parent=1 // pred_check
      _
    $region15: #{mlp2_forward.1} parent=1 // pred_check_branch
      %32 = sbr.rel (0) target = $region17
    $region16: #{mlp2_forward.1} parent=1 // pred_region
      _
    $region17: #{mlp2_forward.1} parent=1 // pred_fallthru
      _
    // Predicated region
    $region18: #{mlp2_forward.1} parent=1 // pred_check
      _
    $region19: #{mlp2_forward.1} parent=1 // pred_check_branch
      %34 = sbr.rel (0) target = $region21
    $region20: #{mlp2_forward.1} parent=1 // pred_region
      _
    $region21: #{mlp2_forward.1} parent=1 // pred_fallthru
      _
    // Predicated region
    $region22: #{mlp2_forward.1} parent=1 // pred_check
      _
    $region23: #{mlp2_forward.1} parent=1 // pred_check_branch
      %36 = sbr.rel (0) target = $region25
    $region24: #{mlp2_forward.1} parent=1 // pred_region
      _
    $region25: #{mlp2_forward.1} parent=1 // pred_fallthru
      _
    // Predicated region
    $region26: #{mlp2_forward.1} parent=1 // pred_check
      _
    $region27: #{mlp2_forward.1} parent=1 // pred_check_branch
      %38 = sbr.rel (0) target = $region29
    $region28: #{mlp2_forward.1} parent=1 // pred_region
      _
    $region29: #{mlp2_forward.1} parent=1 // pred_fallthru
      _
    // Predicated region
    $region30: #{mlp2_forward.1} parent=1 // pred_check
      _
    $region31: #{mlp2_forward.1} parent=1 // pred_check_branch
      %40 = sbr.rel (0) target = $region33
    $region32: #{mlp2_forward.1} parent=1 // pred_region
      %42 = dma.done [#allocation3], 8192
    $region33: #{mlp2_forward.1} parent=1 // pred_fallthru
      _
    %v43 = vld [vmem:[%s0] sm:$0xff]
    %v44 = vld [vmem:[%s0 + $0x8] sm:$0xff]
    %47 = vst [vmem:[#allocation1] ss:$4 sm:$0xff] %v43
    %s48 = scalar_lea.vmem [#allocation1], 32
    %49 = vst [vmem:[%s48] ss:$4 sm:$0xff] %v44
    %v50 = vld.sshfl [vmem:[#allocation1] sm:$0xff pattern:$0x73625140]
    %v51 = vld.sshfl [vmem:[#allocation1 + $0x8] sm:$0xff pattern:$0x73625140]
    %v52 = vld.sshfl [vmem:[#allocation1 + $0x10] sm:$0xff pattern:$0x73625140]
    %v53 = vld.sshfl [vmem:[#allocation1 + $0x18] sm:$0xff pattern:$0x73625140]
    %v54 = vld.sshfl [vmem:[#allocation1 + $0x20] sm:$0xff pattern:$0x73625140]
    %v55 = vld.sshfl [vmem:[#allocation1 + $0x28] sm:$0xff pattern:$0x73625140]
    %v56 = vld.sshfl [vmem:[#allocation1 + $0x30] sm:$0xff pattern:$0x73625140]
    %v57 = vld.sshfl [vmem:[#allocation1 + $0x38] sm:$0xff pattern:$0x73625140]
    %v66 = vpack.c.bf16 %v50, %v50
    %v67 = vpack.c.bf16 %v51, %v51
    %v68 = vpack.c.bf16 %v52, %v52
    %v69 = vpack.c.bf16 %v53, %v53
    %v70 = vpack.c.bf16 %v54, %v54
    %v71 = vpack.c.bf16 %v55, %v55
    %v72 = vpack.c.bf16 %v56, %v56
    %v73 = vpack.c.bf16 %v57, %v57
    %v74 = vld [vmem:[#allocation2] sm:$0xf]
    %v75 = vld [vmem:[#allocation2 + $0x4] sm:$0xf]
    %v76 = vld [vmem:[#allocation2 + $0x8] sm:$0xf]
    %v77 = vld [vmem:[#allocation2 + $0xc] sm:$0xf]
    %v78 = vld [vmem:[#allocation2 + $0x10] sm:$0xf]
    %v79 = vld [vmem:[#allocation2 + $0x14] sm:$0xf]
    %v80 = vld [vmem:[#allocation2 + $0x18] sm:$0xf]
    %v81 = vld [vmem:[#allocation2 + $0x1c] sm:$0xf]
    %v82 = vld [vmem:[#allocation2 + $0x20] sm:$0xf]
    %v83 = vld [vmem:[#allocation2 + $0x24] sm:$0xf]
    %v84 = vld [vmem:[#allocation2 + $0x28] sm:$0xf]
    %v85 = vld [vmem:[#allocation2 + $0x2c] sm:$0xf]
    %v86 = vld [vmem:[#allocation2 + $0x30] sm:$0xf]
    %v87 = vld [vmem:[#allocation2 + $0x34] sm:$0xf]
    %v88 = vld [vmem:[#allocation2 + $0x38] sm:$0xf]
    %v89 = vld [vmem:[#allocation2 + $0x3c] sm:$0xf]
    %v90 = vld [vmem:[#allocation2 + $0x40] sm:$0xf]
    %v91 = vld [vmem:[#allocation2 + $0x44] sm:$0xf]
    %v92 = vld [vmem:[#allocation2 + $0x48] sm:$0xf]
    %v93 = vld [vmem:[#allocation2 + $0x4c] sm:$0xf]
    %v94 = vld [vmem:[#allocation2 + $0x50] sm:$0xf]
    %v95 = vld [vmem:[#allocation2 + $0x54] sm:$0xf]
    %v96 = vld [vmem:[#allocation2 + $0x58] sm:$0xf]
    %v97 = vld [vmem:[#allocation2 + $0x5c] sm:$0xf]
    %v98 = vld [vmem:[#allocation2 + $0x60] sm:$0xf]
    %v99 = vld [vmem:[#allocation2 + $0x64] sm:$0xf]
    %v100 = vld [vmem:[#allocation2 + $0x68] sm:$0xf]
    %v101 = vld [vmem:[#allocation2 + $0x6c] sm:$0xf]
    %v102 = vld [vmem:[#allocation2 + $0x70] sm:$0xf]
    %v103 = vld [vmem:[#allocation2 + $0x74] sm:$0xf]
    %v104 = vld [vmem:[#allocation2 + $0x78] sm:$0xf]
    %v105 = vld [vmem:[#allocation2 + $0x7c] sm:$0xf]
    %v106 = vld [vmem:[#allocation2 + $0x80] sm:$0xf]
    %v107 = vld [vmem:[#allocation2 + $0x84] sm:$0xf]
    %v108 = vld [vmem:[#allocation2 + $0x88] sm:$0xf]
    %v109 = vld [vmem:[#allocation2 + $0x8c] sm:$0xf]
    %v110 = vld [vmem:[#allocation2 + $0x90] sm:$0xf]
    %v111 = vld [vmem:[#allocation2 + $0x94] sm:$0xf]
    %v112 = vld [vmem:[#allocation2 + $0x98] sm:$0xf]
    %v113 = vld [vmem:[#allocation2 + $0x9c] sm:$0xf]
    %v114 = vld [vmem:[#allocation2 + $0xa0] sm:$0xf]
    %v115 = vld [vmem:[#allocation2 + $0xa4] sm:$0xf]
    %v116 = vld [vmem:[#allocation2 + $0xa8] sm:$0xf]
    %v117 = vld [vmem:[#allocation2 + $0xac] sm:$0xf]
    %v118 = vld [vmem:[#allocation2 + $0xb0] sm:$0xf]
    %v119 = vld [vmem:[#allocation2 + $0xb4] sm:$0xf]
    %v120 = vld [vmem:[#allocation2 + $0xb8] sm:$0xf]
    %v121 = vld [vmem:[#allocation2 + $0xbc] sm:$0xf]
    %v122 = vld [vmem:[#allocation2 + $0xc0] sm:$0xf]
    %v123 = vld [vmem:[#allocation2 + $0xc4] sm:$0xf]
    %v124 = vld [vmem:[#allocation2 + $0xc8] sm:$0xf]
    %v125 = vld [vmem:[#allocation2 + $0xcc] sm:$0xf]
    %v126 = vld [vmem:[#allocation2 + $0xd0] sm:$0xf]
    %v127 = vld [vmem:[#allocation2 + $0xd4] sm:$0xf]
    %v128 = vld [vmem:[#allocation2 + $0xd8] sm:$0xf]
    %v129 = vld [vmem:[#allocation2 + $0xdc] sm:$0xf]
    %v130 = vld [vmem:[#allocation2 + $0xe0] sm:$0xf]
    %v131 = vld [vmem:[#allocation2 + $0xe4] sm:$0xf]
    %v132 = vld [vmem:[#allocation2 + $0xe8] sm:$0xf]
    %v133 = vld [vmem:[#allocation2 + $0xec] sm:$0xf]
    %v134 = vld [vmem:[#allocation2 + $0xf0] sm:$0xf]
    %v135 = vld [vmem:[#allocation2 + $0xf4] sm:$0xf]
    %v136 = vld [vmem:[#allocation2 + $0xf8] sm:$0xf]
    %v137 = vld [vmem:[#allocation2 + $0xfc] sm:$0xf]
    %v138 = vld [vmem:[#allocation2 + $0x100] sm:$0xf]
    %v139 = vld [vmem:[#allocation2 + $0x104] sm:$0xf]
    %v140 = vld [vmem:[#allocation2 + $0x108] sm:$0xf]
    %v141 = vld [vmem:[#allocation2 + $0x10c] sm:$0xf]
    %v142 = vld [vmem:[#allocation2 + $0x110] sm:$0xf]
    %v143 = vld [vmem:[#allocation2 + $0x114] sm:$0xf]
    %v144 = vld [vmem:[#allocation2 + $0x118] sm:$0xf]
    %v145 = vld [vmem:[#allocation2 + $0x11c] sm:$0xf]
    %v146 = vld [vmem:[#allocation2 + $0x120] sm:$0xf]
    %v147 = vld [vmem:[#allocation2 + $0x124] sm:$0xf]
    %v148 = vld [vmem:[#allocation2 + $0x128] sm:$0xf]
    %v149 = vld [vmem:[#allocation2 + $0x12c] sm:$0xf]
    %v150 = vld [vmem:[#allocation2 + $0x130] sm:$0xf]
    %v151 = vld [vmem:[#allocation2 + $0x134] sm:$0xf]
    %v152 = vld [vmem:[#allocation2 + $0x138] sm:$0xf]
    %v153 = vld [vmem:[#allocation2 + $0x13c] sm:$0xf]
    %v154 = vld [vmem:[#allocation2 + $0x140] sm:$0xf]
    %v155 = vld [vmem:[#allocation2 + $0x144] sm:$0xf]
    %v156 = vld [vmem:[#allocation2 + $0x148] sm:$0xf]
    %v157 = vld [vmem:[#allocation2 + $0x14c] sm:$0xf]
    %v158 = vld [vmem:[#allocation2 + $0x150] sm:$0xf]
    %v159 = vld [vmem:[#allocation2 + $0x154] sm:$0xf]
    %v160 = vld [vmem:[#allocation2 + $0x158] sm:$0xf]
    %v161 = vld [vmem:[#allocation2 + $0x15c] sm:$0xf]
    %v162 = vld [vmem:[#allocation2 + $0x160] sm:$0xf]
    %v163 = vld [vmem:[#allocation2 + $0x164] sm:$0xf]
    %v164 = vld [vmem:[#allocation2 + $0x168] sm:$0xf]
    %v165 = vld [vmem:[#allocation2 + $0x16c] sm:$0xf]
    %v166 = vld [vmem:[#allocation2 + $0x170] sm:$0xf]
    %v167 = vld [vmem:[#allocation2 + $0x174] sm:$0xf]
    %v168 = vld [vmem:[#allocation2 + $0x178] sm:$0xf]
    %v169 = vld [vmem:[#allocation2 + $0x17c] sm:$0xf]
    %v170 = vld [vmem:[#allocation2 + $0x180] sm:$0xf]
    %v171 = vld [vmem:[#allocation2 + $0x184] sm:$0xf]
    %v172 = vld [vmem:[#allocation2 + $0x188] sm:$0xf]
    %v173 = vld [vmem:[#allocation2 + $0x18c] sm:$0xf]
    %v174 = vld [vmem:[#allocation2 + $0x190] sm:$0xf]
    %v175 = vld [vmem:[#allocation2 + $0x194] sm:$0xf]
    %v176 = vld [vmem:[#allocation2 + $0x198] sm:$0xf]
    %v177 = vld [vmem:[#allocation2 + $0x19c] sm:$0xf]
    %v178 = vld [vmem:[#allocation2 + $0x1a0] sm:$0xf]
    %v179 = vld [vmem:[#allocation2 + $0x1a4] sm:$0xf]
    %v180 = vld [vmem:[#allocation2 + $0x1a8] sm:$0xf]
    %v181 = vld [vmem:[#allocation2 + $0x1ac] sm:$0xf]
    %v182 = vld [vmem:[#allocation2 + $0x1b0] sm:$0xf]
    %v183 = vld [vmem:[#allocation2 + $0x1b4] sm:$0xf]
    %v184 = vld [vmem:[#allocation2 + $0x1b8] sm:$0xf]
    %v185 = vld [vmem:[#allocation2 + $0x1bc] sm:$0xf]
    %v186 = vld [vmem:[#allocation2 + $0x1c0] sm:$0xf]
    %v187 = vld [vmem:[#allocation2 + $0x1c4] sm:$0xf]
    %v188 = vld [vmem:[#allocation2 + $0x1c8] sm:$0xf]
    %v189 = vld [vmem:[#allocation2 + $0x1cc] sm:$0xf]
    %v190 = vld [vmem:[#allocation2 + $0x1d0] sm:$0xf]
    %v191 = vld [vmem:[#allocation2 + $0x1d4] sm:$0xf]
    %v192 = vld [vmem:[#allocation2 + $0x1d8] sm:$0xf]
    %v193 = vld [vmem:[#allocation2 + $0x1dc] sm:$0xf]
    %v194 = vld [vmem:[#allocation2 + $0x1e0] sm:$0xf]
    %v195 = vld [vmem:[#allocation2 + $0x1e4] sm:$0xf]
    %v196 = vld [vmem:[#allocation2 + $0x1e8] sm:$0xf]
    %v197 = vld [vmem:[#allocation2 + $0x1ec] sm:$0xf]
    %v198 = vld [vmem:[#allocation2 + $0x1f0] sm:$0xf]
    %v199 = vld [vmem:[#allocation2 + $0x1f4] sm:$0xf]
    %v200 = vld [vmem:[#allocation2 + $0x1f8] sm:$0xf]
    %v201 = vld [vmem:[#allocation2 + $0x1fc] sm:$0xf]
    %v202 = vld [vmem:[%s2] sm:$0x1]
    %v204 = vperm.slane %v202, 0
    %v334 = vunpack.c.l.b16 %v74
    %v335 = vunpack.c.l.b16 %v75
    %v336 = vunpack.c.l.b16 %v76
    %v337 = vunpack.c.l.b16 %v77
    %v338 = vunpack.c.l.b16 %v78
    %v339 = vunpack.c.l.b16 %v79
    %v340 = vunpack.c.l.b16 %v80
    %v341 = vunpack.c.l.b16 %v81
    %v342 = vunpack.c.l.b16 %v82
    %v343 = vunpack.c.l.b16 %v83
    %v344 = vunpack.c.l.b16 %v84
    %v345 = vunpack.c.l.b16 %v85
    %v346 = vunpack.c.l.b16 %v86
    %v347 = vunpack.c.l.b16 %v87
    %v348 = vunpack.c.l.b16 %v88
    %v349 = vunpack.c.l.b16 %v89
    %v350 = vunpack.c.l.b16 %v90
    %v351 = vunpack.c.l.b16 %v91
    %v352 = vunpack.c.l.b16 %v92
    %v353 = vunpack.c.l.b16 %v93
    %v354 = vunpack.c.l.b16 %v94
    %v355 = vunpack.c.l.b16 %v95
    %v356 = vunpack.c.l.b16 %v96
    %v357 = vunpack.c.l.b16 %v97
    %v358 = vunpack.c.l.b16 %v98
    %v359 = vunpack.c.l.b16 %v99
    %v360 = vunpack.c.l.b16 %v100
    %v361 = vunpack.c.l.b16 %v101
    %v362 = vunpack.c.l.b16 %v102
    %v363 = vunpack.c.l.b16 %v103
    %v364 = vunpack.c.l.b16 %v104
    %v365 = vunpack.c.l.b16 %v105
    %v366 = vunpack.c.l.b16 %v106
    %v367 = vunpack.c.l.b16 %v107
    %v368 = vunpack.c.l.b16 %v108
    %v369 = vunpack.c.l.b16 %v109
    %v370 = vunpack.c.l.b16 %v110
    %v371 = vunpack.c.l.b16 %v111
    %v372 = vunpack.c.l.b16 %v112
    %v373 = vunpack.c.l.b16 %v113
    %v374 = vunpack.c.l.b16 %v114
    %v375 = vunpack.c.l.b16 %v115
    %v376 = vunpack.c.l.b16 %v116
    %v377 = vunpack.c.l.b16 %v117
    %v378 = vunpack.c.l.b16 %v118
    %v379 = vunpack.c.l.b16 %v119
    %v380 = vunpack.c.l.b16 %v120
    %v381 = vunpack.c.l.b16 %v121
    %v382 = vunpack.c.l.b16 %v122
    %v383 = vunpack.c.l.b16 %v123
    %v384 = vunpack.c.l.b16 %v124
    %v385 = vunpack.c.l.b16 %v125
    %v386 = vunpack.c.l.b16 %v126
    %v387 = vunpack.c.l.b16 %v127
    %v388 = vunpack.c.l.b16 %v128
    %v389 = vunpack.c.l.b16 %v129
    %v390 = vunpack.c.l.b16 %v130
    %v391 = vunpack.c.l.b16 %v131
    %v392 = vunpack.c.l.b16 %v132
    %v393 = vunpack.c.l.b16 %v133
    %v394 = vunpack.c.l.b16 %v134
    %v395 = vunpack.c.l.b16 %v135
    %v396 = vunpack.c.l.b16 %v136
    %v397 = vunpack.c.l.b16 %v137
    %v398 = vunpack.c.l.b16 %v138
    %v399 = vunpack.c.l.b16 %v139
    %v400 = vunpack.c.l.b16 %v140
    %v401 = vunpack.c.l.b16 %v141
    %v402 = vunpack.c.l.b16 %v142
    %v403 = vunpack.c.l.b16 %v143
    %v404 = vunpack.c.l.b16 %v144
    %v405 = vunpack.c.l.b16 %v145
    %v406 = vunpack.c.l.b16 %v146
    %v407 = vunpack.c.l.b16 %v147
    %v408 = vunpack.c.l.b16 %v148
    %v409 = vunpack.c.l.b16 %v149
    %v410 = vunpack.c.l.b16 %v150
    %v411 = vunpack.c.l.b16 %v151
    %v412 = vunpack.c.l.b16 %v152
    %v413 = vunpack.c.l.b16 %v153
    %v414 = vunpack.c.l.b16 %v154
    %v415 = vunpack.c.l.b16 %v155
    %v416 = vunpack.c.l.b16 %v156
    %v417 = vunpack.c.l.b16 %v157
    %v418 = vunpack.c.l.b16 %v158
    %v419 = vunpack.c.l.b16 %v159
    %v420 = vunpack.c.l.b16 %v160
    %v421 = vunpack.c.l.b16 %v161
    %v422 = vunpack.c.l.b16 %v162
    %v423 = vunpack.c.l.b16 %v163
    %v424 = vunpack.c.l.b16 %v164
    %v425 = vunpack.c.l.b16 %v165
    %v426 = vunpack.c.l.b16 %v166
    %v427 = vunpack.c.l.b16 %v167
    %v428 = vunpack.c.l.b16 %v168
    %v429 = vunpack.c.l.b16 %v169
    %v430 = vunpack.c.l.b16 %v170
    %v431 = vunpack.c.l.b16 %v171
    %v432 = vunpack.c.l.b16 %v172
    %v433 = vunpack.c.l.b16 %v173
    %v434 = vunpack.c.l.b16 %v174
    %v435 = vunpack.c.l.b16 %v175
    %v436 = vunpack.c.l.b16 %v176
    %v437 = vunpack.c.l.b16 %v177
    %v438 = vunpack.c.l.b16 %v178
    %v439 = vunpack.c.l.b16 %v179
    %v440 = vunpack.c.l.b16 %v180
    %v441 = vunpack.c.l.b16 %v181
    %v442 = vunpack.c.l.b16 %v182
    %v443 = vunpack.c.l.b16 %v183
    %v444 = vunpack.c.l.b16 %v184
    %v445 = vunpack.c.l.b16 %v185
    %v446 = vunpack.c.l.b16 %v186
    %v447 = vunpack.c.l.b16 %v187
    %v448 = vunpack.c.l.b16 %v188
    %v449 = vunpack.c.l.b16 %v189
    %v450 = vunpack.c.l.b16 %v190
    %v451 = vunpack.c.l.b16 %v191
    %v452 = vunpack.c.l.b16 %v192
    %v453 = vunpack.c.l.b16 %v193
    %v454 = vunpack.c.l.b16 %v194
    %v455 = vunpack.c.l.b16 %v195
    %v456 = vunpack.c.l.b16 %v196
    %v457 = vunpack.c.l.b16 %v197
    %v458 = vunpack.c.l.b16 %v198
    %v459 = vunpack.c.l.b16 %v199
    %v460 = vunpack.c.l.b16 %v200
    %v461 = vunpack.c.l.b16 %v201
    %v462 = vpack.c.b16 %v335, %v334
    %v463 = vpack.c.b16 %v337, %v336
    %v464 = vpack.c.b16 %v339, %v338
    %v465 = vpack.c.b16 %v341, %v340
    %v466 = vpack.c.b16 %v343, %v342
    %v467 = vpack.c.b16 %v345, %v344
    %v468 = vpack.c.b16 %v347, %v346
    %v469 = vpack.c.b16 %v349, %v348
    %v470 = vpack.c.b16 %v351, %v350
    %v471 = vpack.c.b16 %v353, %v352
    %v472 = vpack.c.b16 %v355, %v354
    %v473 = vpack.c.b16 %v357, %v356
    %v474 = vpack.c.b16 %v359, %v358
    %v475 = vpack.c.b16 %v361, %v360
    %v476 = vpack.c.b16 %v363, %v362
    %v477 = vpack.c.b16 %v365, %v364
    %v478 = vpack.c.b16 %v367, %v366
    %v479 = vpack.c.b16 %v369, %v368
    %v480 = vpack.c.b16 %v371, %v370
    %v481 = vpack.c.b16 %v373, %v372
    %v482 = vpack.c.b16 %v375, %v374
    %v483 = vpack.c.b16 %v377, %v376
    %v484 = vpack.c.b16 %v379, %v378
    %v485 = vpack.c.b16 %v381, %v380
    %v486 = vpack.c.b16 %v383, %v382
    %v487 = vpack.c.b16 %v385, %v384
    %v488 = vpack.c.b16 %v387, %v386
    %v489 = vpack.c.b16 %v389, %v388
    %v490 = vpack.c.b16 %v391, %v390
    %v491 = vpack.c.b16 %v393, %v392
    %v492 = vpack.c.b16 %v395, %v394
    %v493 = vpack.c.b16 %v397, %v396
    %v494 = vpack.c.b16 %v399, %v398
    %v495 = vpack.c.b16 %v401, %v400
    %v496 = vpack.c.b16 %v403, %v402
    %v497 = vpack.c.b16 %v405, %v404
    %v498 = vpack.c.b16 %v407, %v406
    %v499 = vpack.c.b16 %v409, %v408
    %v500 = vpack.c.b16 %v411, %v410
    %v501 = vpack.c.b16 %v413, %v412
    %v502 = vpack.c.b16 %v415, %v414
    %v503 = vpack.c.b16 %v417, %v416
    %v504 = vpack.c.b16 %v419, %v418
    %v505 = vpack.c.b16 %v421, %v420
    %v506 = vpack.c.b16 %v423, %v422
    %v507 = vpack.c.b16 %v425, %v424
    %v508 = vpack.c.b16 %v427, %v426
    %v509 = vpack.c.b16 %v429, %v428
    %v510 = vpack.c.b16 %v431, %v430
    %v511 = vpack.c.b16 %v433, %v432
    %v512 = vpack.c.b16 %v435, %v434
    %v513 = vpack.c.b16 %v437, %v436
    %v514 = vpack.c.b16 %v439, %v438
    %v515 = vpack.c.b16 %v441, %v440
    %v516 = vpack.c.b16 %v443, %v442
    %v517 = vpack.c.b16 %v445, %v444
    %v518 = vpack.c.b16 %v447, %v446
    %v519 = vpack.c.b16 %v449, %v448
    %v520 = vpack.c.b16 %v451, %v450
    %v521 = vpack.c.b16 %v453, %v452
    %v522 = vpack.c.b16 %v455, %v454
    %v523 = vpack.c.b16 %v457, %v456
    %v524 = vpack.c.b16 %v459, %v458
    %v525 = vpack.c.b16 %v461, %v460
    %590 = vmatpush.bf16.msra.mxu0 %v469
    %591 = vmatpush.bf16.msra.mxu0 %v468
    %592 = vmatpush.bf16.msra.mxu0 %v467
    %593 = vmatpush.bf16.msra.mxu0 %v466
    %594 = vmatpush.bf16.msra.mxu0 %v465
    %595 = vmatpush.bf16.msra.mxu0 %v464
    %596 = vmatpush.bf16.msra.mxu0 %v463
    %597 = vmatpush.bf16.msra.mxu0 %v462
    %598 = vmatmul.bf16.gmra.mxu0 %v66
    %v599 = vpop.f32.mrf.mxu0
    %v600 = vadd.f32 %v204, %v599
    %v601 = vpop.f32.mrf.mxu0
    %602 = vdwg.mxu0
    %603 = vmatpush.bf16.msra.mxu0 %v477
    %604 = vmatpush.bf16.msra.mxu0 %v476
    %605 = vmatpush.bf16.msra.mxu0 %v475
    %606 = vmatpush.bf16.msra.mxu0 %v474
    %607 = vmatpush.bf16.msra.mxu0 %v473
    %608 = vmatpush.bf16.msra.mxu0 %v472
    %609 = vmatpush.bf16.msra.mxu0 %v471
    %610 = vmatpush.bf16.msra.mxu0 %v470
    %611 = vmatmul.bf16.gmra.mxu0 %v67
    %v612 = vpop.f32.mrf.mxu0
    %v613 = vadd.f32 %v600, %v612
    %v614 = vpop.f32.mrf.mxu0
    %615 = vdwg.mxu0
    %616 = vmatpush.bf16.msra.mxu0 %v485
    %617 = vmatpush.bf16.msra.mxu0 %v484
    %618 = vmatpush.bf16.msra.mxu0 %v483
    %619 = vmatpush.bf16.msra.mxu0 %v482
    %620 = vmatpush.bf16.msra.mxu0 %v481
    %621 = vmatpush.bf16.msra.mxu0 %v480
    %622 = vmatpush.bf16.msra.mxu0 %v479
    %623 = vmatpush.bf16.msra.mxu0 %v478
    %624 = vmatmul.bf16.gmra.mxu0 %v68
    %v625 = vpop.f32.mrf.mxu0
    %v626 = vadd.f32 %v613, %v625
    %v627 = vpop.f32.mrf.mxu0
    %628 = vdwg.mxu0
    %629 = vmatpush.bf16.msra.mxu0 %v493
    %630 = vmatpush.bf16.msra.mxu0 %v492
    %631 = vmatpush.bf16.msra.mxu0 %v491
    %632 = vmatpush.bf16.msra.mxu0 %v490
    %633 = vmatpush.bf16.msra.mxu0 %v489
    %634 = vmatpush.bf16.msra.mxu0 %v488
    %635 = vmatpush.bf16.msra.mxu0 %v487
    %636 = vmatpush.bf16.msra.mxu0 %v486
    %637 = vmatmul.bf16.gmra.mxu0 %v69
    %v638 = vpop.f32.mrf.mxu0
    %v639 = vadd.f32 %v626, %v638
    %v640 = vpop.f32.mrf.mxu0
    %641 = vdwg.mxu0
    %642 = vmatpush.bf16.msra.mxu0 %v501
    %643 = vmatpush.bf16.msra.mxu0 %v500
    %644 = vmatpush.bf16.msra.mxu0 %v499
    %645 = vmatpush.bf16.msra.mxu0 %v498
    %646 = vmatpush.bf16.msra.mxu0 %v497
    %647 = vmatpush.bf16.msra.mxu0 %v496
    %648 = vmatpush.bf16.msra.mxu0 %v495
    %649 = vmatpush.bf16.msra.mxu0 %v494
    %650 = vmatmul.bf16.gmra.mxu0 %v70
    %v651 = vpop.f32.mrf.mxu0
    %v652 = vadd.f32 %v639, %v651
    %v653 = vpop.f32.mrf.mxu0
    %654 = vdwg.mxu0
    %655 = vmatpush.bf16.msra.mxu0 %v509
    %656 = vmatpush.bf16.msra.mxu0 %v508
    %657 = vmatpush.bf16.msra.mxu0 %v507
    %658 = vmatpush.bf16.msra.mxu0 %v506
    %659 = vmatpush.bf16.msra.mxu0 %v505
    %660 = vmatpush.bf16.msra.mxu0 %v504
    %661 = vmatpush.bf16.msra.mxu0 %v503
    %662 = vmatpush.bf16.msra.mxu0 %v502
    %663 = vmatmul.bf16.gmra.mxu0 %v71
    %v664 = vpop.f32.mrf.mxu0
    %v665 = vadd.f32 %v652, %v664
    %v666 = vpop.f32.mrf.mxu0
    %667 = vdwg.mxu0
    %668 = vmatpush.bf16.msra.mxu0 %v517
    %669 = vmatpush.bf16.msra.mxu0 %v516
    %670 = vmatpush.bf16.msra.mxu0 %v515
    %671 = vmatpush.bf16.msra.mxu0 %v514
    %672 = vmatpush.bf16.msra.mxu0 %v513
    %673 = vmatpush.bf16.msra.mxu0 %v512
    %674 = vmatpush.bf16.msra.mxu0 %v511
    %675 = vmatpush.bf16.msra.mxu0 %v510
    %676 = vmatmul.bf16.gmra.mxu0 %v72
    %v677 = vpop.f32.mrf.mxu0
    %v678 = vadd.f32 %v665, %v677
    %v679 = vpop.f32.mrf.mxu0
    %680 = vdwg.mxu0
    %681 = vmatpush.bf16.msra.mxu0 %v525
    %682 = vmatpush.bf16.msra.mxu0 %v524
    %683 = vmatpush.bf16.msra.mxu0 %v523
    %684 = vmatpush.bf16.msra.mxu0 %v522
    %685 = vmatpush.bf16.msra.mxu0 %v521
    %686 = vmatpush.bf16.msra.mxu0 %v520
    %687 = vmatpush.bf16.msra.mxu0 %v519
    %688 = vmatpush.bf16.msra.mxu0 %v518
    %689 = vmatmul.bf16.gmra.mxu0 %v73
    %v690 = vpop.f32.mrf.mxu0
    %v691 = vadd.f32 %v678, %v690
    %v692 = vpop.f32.mrf.mxu0
    %693 = vdwg.mxu0
    %v694 = vmax.f32 %v691, 0.0
    %v695 = vpack.c.bf16 %v694, %v694
    %v696 = vld [vmem:[%s3] sm:$0xf]
    %v697 = vld [vmem:[%s3 + $0x4] sm:$0xf]
    %v698 = vld [vmem:[%s3 + $0x8] sm:$0xf]
    %v699 = vld [vmem:[%s3 + $0xc] sm:$0xf]
    %v700 = vld [vmem:[%s3 + $0x10] sm:$0xf]
    %v701 = vld [vmem:[%s3 + $0x14] sm:$0xf]
    %v702 = vld [vmem:[%s3 + $0x18] sm:$0xf]
    %v703 = vld [vmem:[%s3 + $0x1c] sm:$0xf]
    %v704 = vld [vmem:[%s3 + $0x20] sm:$0xf]
    %v705 = vld [vmem:[%s3 + $0x24] sm:$0xf]
    %v706 = vld [vmem:[%s3 + $0x28] sm:$0xf]
    %v707 = vld [vmem:[%s3 + $0x2c] sm:$0xf]
    %v708 = vld [vmem:[%s3 + $0x30] sm:$0xf]
    %v709 = vld [vmem:[%s3 + $0x34] sm:$0xf]
    %v710 = vld [vmem:[%s3 + $0x38] sm:$0xf]
    %v711 = vld [vmem:[%s3 + $0x3c] sm:$0xf]
    %v712 = vld [vmem:[%s4] sm:$0x1]
    %v714 = vperm.slane %v712, 0
    %v732 = vunpack.c.l.b16 %v696
    %v733 = vunpack.c.l.b16 %v697
    %v734 = vunpack.c.l.b16 %v698
    %v735 = vunpack.c.l.b16 %v699
    %v736 = vunpack.c.l.b16 %v700
    %v737 = vunpack.c.l.b16 %v701
    %v738 = vunpack.c.l.b16 %v702
    %v739 = vunpack.c.l.b16 %v703
    %v740 = vunpack.c.l.b16 %v704
    %v741 = vunpack.c.l.b16 %v705
    %v742 = vunpack.c.l.b16 %v706
    %v743 = vunpack.c.l.b16 %v707
    %v744 = vunpack.c.l.b16 %v708
    %v745 = vunpack.c.l.b16 %v709
    %v746 = vunpack.c.l.b16 %v710
    %v747 = vunpack.c.l.b16 %v711
    %v748 = vpack.c.b16 %v733, %v732
    %v749 = vpack.c.b16 %v735, %v734
    %v750 = vpack.c.b16 %v737, %v736
    %v751 = vpack.c.b16 %v739, %v738
    %v752 = vpack.c.b16 %v741, %v740
    %v753 = vpack.c.b16 %v743, %v742
    %v754 = vpack.c.b16 %v745, %v744
    %v755 = vpack.c.b16 %v747, %v746
    %764 = vmatpush.bf16.msra.mxu0 %v755
    %765 = vmatpush.bf16.msra.mxu0 %v754
    %766 = vmatpush.bf16.msra.mxu0 %v753
    %767 = vmatpush.bf16.msra.mxu0 %v752
    %768 = vmatpush.bf16.msra.mxu0 %v751
    %769 = vmatpush.bf16.msra.mxu0 %v750
    %770 = vmatpush.bf16.msra.mxu0 %v749
    %771 = vmatpush.bf16.msra.mxu0 %v748
    %772 = vmatmul.bf16.gmra.mxu0 %v695
    %v773 = vpop.f32.mrf.mxu0
    %v774 = vadd.f32 %v714, %v773
    %v775 = vpop.f32.mrf.mxu0
    %776 = vdwg.mxu0
    %v777 = vmax.f32 %v774, 0.0
    %v778 = vpack.c.bf16 %v777, %v777
    %v779 = vld [vmem:[%s5] sm:$0xf]
    %v780 = vld [vmem:[%s5 + $0x4] sm:$0xf]
    %v781 = vld [vmem:[%s5 + $0x8] sm:$0xf]
    %v782 = vld [vmem:[%s5 + $0xc] sm:$0xf]
    %v783 = vld [vmem:[%s5 + $0x10] sm:$0xf]
    %v784 = vld [vmem:[%s5 + $0x14] sm:$0xf]
    %v785 = vld [vmem:[%s5 + $0x18] sm:$0xf]
    %v786 = vld [vmem:[%s5 + $0x1c] sm:$0xf]
    %v787 = vld [vmem:[%s5 + $0x20] sm:$0xf]
    %v788 = vld [vmem:[%s5 + $0x24] sm:$0xf]
    %v789 = vld [vmem:[%s5 + $0x28] sm:$0xf]
    %v790 = vld [vmem:[%s5 + $0x2c] sm:$0xf]
    %v791 = vld [vmem:[%s5 + $0x30] sm:$0xf]
    %v792 = vld [vmem:[%s5 + $0x34] sm:$0xf]
    %v793 = vld [vmem:[%s5 + $0x38] sm:$0xf]
    %v794 = vld [vmem:[%s5 + $0x3c] sm:$0xf]
    %v795 = vld [vmem:[%s6] sm:$0x1]
    %v797 = vperm.slane %v795, 0
    %v815 = vunpack.c.l.b16 %v779
    %v816 = vunpack.c.l.b16 %v780
    %v817 = vunpack.c.l.b16 %v781
    %v818 = vunpack.c.l.b16 %v782
    %v819 = vunpack.c.l.b16 %v783
    %v820 = vunpack.c.l.b16 %v784
    %v821 = vunpack.c.l.b16 %v785
    %v822 = vunpack.c.l.b16 %v786
    %v823 = vunpack.c.l.b16 %v787
    %v824 = vunpack.c.l.b16 %v788
    %v825 = vunpack.c.l.b16 %v789
    %v826 = vunpack.c.l.b16 %v790
    %v827 = vunpack.c.l.b16 %v791
    %v828 = vunpack.c.l.b16 %v792
    %v829 = vunpack.c.l.b16 %v793
    %v830 = vunpack.c.l.b16 %v794
    %v831 = vpack.c.b16 %v816, %v815
    %v832 = vpack.c.b16 %v818, %v817
    %v833 = vpack.c.b16 %v820, %v819
    %v834 = vpack.c.b16 %v822, %v821
    %v835 = vpack.c.b16 %v824, %v823
    %v836 = vpack.c.b16 %v826, %v825
    %v837 = vpack.c.b16 %v828, %v827
    %v838 = vpack.c.b16 %v830, %v829
    %847 = vmatpush.bf16.msra.mxu0 %v838
    %848 = vmatpush.bf16.msra.mxu0 %v837
    %849 = vmatpush.bf16.msra.mxu0 %v836
    %850 = vmatpush.bf16.msra.mxu0 %v835
    %851 = vmatpush.bf16.msra.mxu0 %v834
    %852 = vmatpush.bf16.msra.mxu0 %v833
    %853 = vmatpush.bf16.msra.mxu0 %v832
    %854 = vmatpush.bf16.msra.mxu0 %v831
    %855 = vmatmul.bf16.gmra.mxu0 %v778
    %v856 = vpop.f32.mrf.mxu0
    %v857 = vadd.f32 %v797, %v856
    %v858 = vpop.f32.mrf.mxu0
    %859 = vdwg.mxu0
    %vm860 = vcmask 517120
    %861 = vst.msk [vmem:[#allocation5] sm:$0x3] %vm860, %v857
    // Predicated region
    $region34: #{mlp2_forward.1} parent=1 // pred_check
      _
    $region35: #{mlp2_forward.1} parent=1 // pred_check_branch
      %863 = sbr.rel (0) target = $region37
    $region36: #{mlp2_forward.1} parent=1 // pred_region
      %865 = vsyncadd [#allocation4], 0
      %s867 = sshll.u32 [#allocation5], 4
      %s868 = int_to_ptr.vmem [resolvable:$true] %s867
      %s869 = sshll.u32 %s7, 4
      %s870 = int_to_ptr.hbm [resolvable:$true] %s869
      %872 = dma.vmem_to_hbm [thread:$0]  %s868, 32, %s870, [#allocation4]
    $region37: #{mlp2_forward.1} parent=1 // pred_fallthru
      _
    // Predicated region
    $region38: #{mlp2_forward.1} parent=1 // pred_check
      _
    $region39: #{mlp2_forward.1} parent=1 // pred_check_branch
      %874 = sbr.rel (0) target = $region41
    $region40: #{mlp2_forward.1} parent=1 // pred_region
      %876 = dma.done [#allocation4], 32
    $region41: #{mlp2_forward.1} parent=1 // pred_fallthru
      _
    %877 = vsyncpa [#allocation3], 1
    %878 = vsyncpa [#allocation4], 1

</llo_original>
